<compile_context>
chip_gen: v7x
topology: tpu7x:2x2x1
jax: 0.10.0
libtpu: 0.0.40
codegen_flags: <defaults>
</compile_context>

<pallas_src>
import jax
import jax.numpy as jnp
from jax.experimental import pallas as pl
from jax.experimental.pallas import tpu as pltpu


def _round_up(n, m):
    return ((n + m - 1) // m) * m


def _cdiv(a, b):
    return -(-a // b)


def mlp_kernel(x_ref, w1_ref, b1_ref, w2_ref, b2_ref, w3_ref, b3_ref, o_ref):
    # --- layer 1: Linear(input_size, 128) + ReLU --------------------------------
    # Stream x as f32 and cast to bf16 on the VPU (free slot) right before the
    # MXU dot; accumulate in f32.
    x_bf = x_ref[...].astype(jnp.bfloat16)                       # (TB, in)
    h1 = jnp.dot(x_bf, w1_ref[...], preferred_element_type=jnp.float32)
    h1 = jnp.maximum(h1 + b1_ref[...], 0.0)                      # (TB, 128)

    # --- dropout(p=0.2): identity in eval mode ----------------------------------

    # --- layer 2: Linear(128, 64) + ReLU -----------------------------------------
    h2 = jnp.dot(h1.astype(jnp.bfloat16), w2_ref[...],
                 preferred_element_type=jnp.float32)
    h2 = jnp.maximum(h2 + b2_ref[...], 0.0)                      # (TB, 64)

    # --- layer 3: Linear(64, 1) + Sigmoid, produced lane-dense ------------------
    # Contract the feature dim of both operands (RHS-transposed matmul) so the
    # result is a (1, TB) row with the batch in the lane dimension -> the output
    # store is a full-width vst instead of TB/8 masked column stores.
    h3 = jax.lax.dot_general(
        w3_ref[...], h2,
        dimension_numbers=(((1,), (1,)), ((), ())),
        preferred_element_type=jnp.float32)                      # (1, TB)
    o_ref[0] = jax.nn.sigmoid(h3 + b3_ref[0, 0])                 # scalar bias (SMEM)


def neural_net_forward(x, prepared_params, *, tile_b=4096):
    """Fused 3-layer MLP forward. x: (B, input_size) f32 -> (B, 1) f32.

    `prepared_params` must come from prepare_params() (one-time weight prep)."""
    w1, b1, w2, b2, w3, b3 = prepared_params
    B, in_size = x.shape
    h1_dim = w1.shape[1]   # 128
    h2_dim = w2.shape[1]   # 64

    # Batch tile: large to amortize ~0.35us/step grid overhead, but split into
    # >=2 tiles whenever possible so the "parallel" axis shards across both
    # v7x TensorCores.  8-aligned for the sublane constraint.
    TB = min(tile_b, _round_up(max((B + 1) // 2, 1), 8))
    num_tiles = _cdiv(B, TB)          # non-divisible grid: no jnp.pad pass over x

    rows = num_tiles * TB
    flops = 2 * rows * (in_size * h1_dim + h1_dim * h2_dim + h2_dim * 1)
    bytes_accessed = (
        rows * in_size * 4             # f32 x stream (cast to bf16 in-kernel)
        + rows * 4                     # f32 output
        + w1.size * 2 + w2.size * 2    # bf16 weights
        + (b1.size + b2.size + w3.size + b3.size) * 4
    )

    out = pl.pallas_call(
        mlp_kernel,
        out_shape=jax.ShapeDtypeStruct((num_tiles, 1, TB), jnp.float32),
        grid=(num_tiles,),
        in_specs=[
            pl.BlockSpec((TB, in_size), lambda i: (i, 0)),       # x tile (streamed)
            pl.BlockSpec((in_size, h1_dim), lambda i: (0, 0)),   # w1 (resident)
            pl.BlockSpec((1, h1_dim), lambda i: (0, 0)),         # b1 (resident)
            pl.BlockSpec((h1_dim, h2_dim), lambda i: (0, 0)),    # w2 (resident)
            pl.BlockSpec((1, h2_dim), lambda i: (0, 0)),         # b2 (resident)
            pl.BlockSpec((1, h2_dim), lambda i: (0, 0)),         # w3 row (resident)
            pl.BlockSpec(memory_space=pltpu.MemorySpace.SMEM),   # b3 scalar
        ],
        out_specs=pl.BlockSpec((1, 1, TB), lambda i: (i, 0, 0)), # lane-dense row
        compiler_params=pltpu.CompilerParams(
            dimension_semantics=("parallel",),
            vmem_limit_bytes=32 * 1024 * 1024,   # v5e default is 16 MiB; 32 MiB
                                                 # covers tile_b up to ~8192
        ),
        cost_estimate=pl.CostEstimate(
            flops=flops,
            transcendentals=2 * rows,            # exp + reciprocal per sigmoid
            bytes_accessed=bytes_accessed,
        ),
    )(x, w1, b1, w2, b2, w3, b3)

    # (num_tiles, 1, TB) -> (B, 1): contiguous reshape (free) + tiny tail slice.
    return out.reshape(num_tiles * TB, 1)[:B]


def init_params(key, input_size):
    """PyTorch-layout params: nn.Linear default init (uniform +-1/sqrt(fan_in)),
    weights stored as (out_features, in_features), biases as (out_features,)."""
    def linear(k, fan_in, fan_out):
        kw, kb = jax.random.split(k)
        bound = 1.0 / (fan_in ** 0.5)
        w = jax.random.uniform(kw, (fan_out, fan_in), jnp.float32, -bound, bound)
        b = jax.random.uniform(kb, (fan_out,), jnp.float32, -bound, bound)
        return w, b

    k1, k2, k3 = jax.random.split(key, 3)
    w1, b1 = linear(k1, input_size, 128)
    w2, b2 = linear(k2, 128, 64)
    w3, b3 = linear(k3, 64, 1)
    return (w1, b1, w2, b2, w3, b3)


def prepare_params(params):
    """One-time weight prep (hoisted out of the hot forward path):
    transpose to (in, out), cast MXU weights to bf16, reshape biases."""
    w1, b1, w2, b2, w3, b3 = params
    return (
        jnp.asarray(w1).T.astype(jnp.bfloat16),            # (in, 128)
        jnp.asarray(b1).reshape(1, -1).astype(jnp.float32),
        jnp.asarray(w2).T.astype(jnp.bfloat16),            # (128, 64)
        jnp.asarray(b2).reshape(1, -1).astype(jnp.float32),
        jnp.asarray(w3).reshape(1, -1).astype(jnp.float32),  # (1, 64) row
        jnp.asarray(b3).reshape(1, 1).astype(jnp.float32),   # SMEM scalar
    )


if __name__ == "__main__":
    INPUT_SIZE = 32
    BATCH = 20   # not a multiple of the tile -> exercises the non-divisible tail

    key = jax.random.PRNGKey(0)
    k_params, k_x = jax.random.split(key)

    params = init_params(k_params, INPUT_SIZE)
    prepared = prepare_params(params)                    # one-time prep
    x = jax.random.normal(k_x, (BATCH, INPUT_SIZE), jnp.float32)

    out = jax.block_until_ready(neural_net_forward(x, prepared))

    # Pure-JAX f32 reference (eval-mode forward, PyTorch layout). The kernel
    # uses bf16 MXU inputs, so tolerance is loosened accordingly.
    w1, b1, w2, b2, w3, b3 = params
    h = jnp.maximum(x @ w1.T + b1, 0.0)
    h = jnp.maximum(h @ w2.T + b2, 0.0)
    ref = jax.nn.sigmoid(h @ w3.T + b3)

    assert out.shape == (BATCH, 1)
    assert jnp.allclose(out, ref, atol=2e-2, rtol=2e-2)

    print("KERNEL_OK")
</pallas_src>

<mosaic_0001>
module attributes {stable_mosaic.version = 11 : i64} {
  func.func @mlp_kernel(%arg0: i32, %arg1: memref<16x32xf32, #tpu.memory_space<vmem>>, %arg2: memref<32x128xbf16, #tpu.memory_space<vmem>>, %arg3: memref<1x128xf32, #tpu.memory_space<vmem>>, %arg4: memref<128x64xbf16, #tpu.memory_space<vmem>>, %arg5: memref<1x64xf32, #tpu.memory_space<vmem>>, %arg6: memref<1x64xf32, #tpu.memory_space<vmem>>, %arg7: memref<1x1xf32, #tpu.memory_space<smem>>, %arg8: memref<1x1x16xf32, #tpu.memory_space<vmem>>) attributes {dimension_semantics = [#tpu.dimension_semantics<parallel>], iteration_bounds = array<i64: 2>, scalar_prefetch = 0 : i64, scratch_operands = 0 : i64, tpu.core_type = #tpu.core_type<tc>, window_params = [{transform_indices = @transform_0, window_bounds = array<i64: 16, 32>}, {pipeline_mode = #tpu.pipeline_mode<synchronous>, transform_indices = @transform_1, window_bounds = array<i64: 32, 128>}, {pipeline_mode = #tpu.pipeline_mode<synchronous>, transform_indices = @transform_2, window_bounds = array<i64: 1, 128>}, {pipeline_mode = #tpu.pipeline_mode<synchronous>, transform_indices = @transform_3, window_bounds = array<i64: 128, 64>}, {pipeline_mode = #tpu.pipeline_mode<synchronous>, transform_indices = @transform_4, window_bounds = array<i64: 1, 64>}, {pipeline_mode = #tpu.pipeline_mode<synchronous>, transform_indices = @transform_5, window_bounds = array<i64: 1, 64>}, {transform_indices = @transform_6, window_bounds = array<i64: 1, 1>}, {transform_indices = @transform_7, window_bounds = array<i64: 1, 1, 16>}]} {
    %c0 = arith.constant 0 : index
    %c0_0 = arith.constant 0 : index
    %0 = vector.load %arg1[%c0, %c0_0] : memref<16x32xf32, #tpu.memory_space<vmem>>, vector<16x32xf32>
    %1 = arith.truncf %0 : vector<16x32xf32> to vector<16x32xbf16>
    %c0_1 = arith.constant 0 : index
    %c0_2 = arith.constant 0 : index
    %2 = vector.load %arg2[%c0_1, %c0_2] : memref<32x128xbf16, #tpu.memory_space<vmem>>, vector<32x128xbf16>
    %cst = arith.constant dense<0.000000e+00> : vector<16x128xf32>
    %3 = tpu.matmul %1, %2, %cst {dimension_numbers = #tpu.dot_dimension_numbers<[1], [0], [0], [1], [0, 0, 1, 1], [], []>} : vector<16x32xbf16>, vector<32x128xbf16>, vector<16x128xf32> -> vector<16x128xf32>
    %c0_3 = arith.constant 0 : index
    %c0_4 = arith.constant 0 : index
    %4 = vector.load %arg3[%c0_3, %c0_4] : memref<1x128xf32, #tpu.memory_space<vmem>>, vector<1x128xf32>
    %5 = vector.broadcast %4 : vector<1x128xf32> to vector<16x128xf32>
    %6 = arith.addf %3, %5 : vector<16x128xf32>
    %cst_5 = arith.constant 0.000000e+00 : f32
    %7 = vector.broadcast %cst_5 : f32 to vector<16x128xf32>
    %8 = arith.maximumf %6, %7 : vector<16x128xf32>
    %9 = arith.truncf %8 : vector<16x128xf32> to vector<16x128xbf16>
    %c0_6 = arith.constant 0 : index
    %c0_7 = arith.constant 0 : index
    %10 = vector.load %arg4[%c0_6, %c0_7] : memref<128x64xbf16, #tpu.memory_space<vmem>>, vector<128x64xbf16>
    %cst_8 = arith.constant dense<0.000000e+00> : vector<16x64xf32>
    %11 = tpu.matmul %9, %10, %cst_8 {dimension_numbers = #tpu.dot_dimension_numbers<[1], [0], [0], [1], [0, 0, 1, 1], [], []>} : vector<16x128xbf16>, vector<128x64xbf16>, vector<16x64xf32> -> vector<16x64xf32>
    %c0_9 = arith.constant 0 : index
    %c0_10 = arith.constant 0 : index
    %12 = vector.load %arg5[%c0_9, %c0_10] : memref<1x64xf32, #tpu.memory_space<vmem>>, vector<1x64xf32>
    %13 = vector.broadcast %12 : vector<1x64xf32> to vector<16x64xf32>
    %14 = arith.addf %11, %13 : vector<16x64xf32>
    %cst_11 = arith.constant 0.000000e+00 : f32
    %15 = vector.broadcast %cst_11 : f32 to vector<16x64xf32>
    %16 = arith.maximumf %14, %15 : vector<16x64xf32>
    %c0_12 = arith.constant 0 : index
    %c0_13 = arith.constant 0 : index
    %17 = vector.load %arg6[%c0_12, %c0_13] : memref<1x64xf32, #tpu.memory_space<vmem>>, vector<1x64xf32>
    %cst_14 = arith.constant dense<0.000000e+00> : vector<1x16xf32>
    %18 = tpu.matmul %17, %16, %cst_14 {dimension_numbers = #tpu.dot_dimension_numbers<[1], [1], [0], [0], [0, 0, 1, 0], [], []>} : vector<1x64xf32>, vector<16x64xf32>, vector<1x16xf32> -> vector<1x16xf32>
    %c0_15 = arith.constant 0 : index
    %c0_16 = arith.constant 0 : index
    %19 = memref.load %arg7[%c0_15, %c0_16] : memref<1x1xf32, #tpu.memory_space<smem>>
    %20 = vector.broadcast %19 : f32 to vector<1x16xf32>
    %21 = arith.addf %18, %20 : vector<1x16xf32>
    %22 = arith.negf %21 : vector<1x16xf32>
    %23 = math.exp %22 : vector<1x16xf32>
    %cst_17 = arith.constant 1.000000e+00 : f32
    %24 = vector.broadcast %cst_17 : f32 to vector<1x16xf32>
    %25 = arith.addf %24, %23 : vector<1x16xf32>
    %26 = arith.divf %24, %25 : vector<1x16xf32>
    %c0_18 = arith.constant 0 : index
    %c0_19 = arith.constant 0 : index
    %c0_20 = arith.constant 0 : index
    %27 = vector.load %arg8[%c0_18, %c0_19, %c0_20] : memref<1x1x16xf32, #tpu.memory_space<vmem>>, vector<1x1x16xf32>
    %28 = vector.shape_cast %27 : vector<1x1x16xf32> to vector<1x16xf32>
    %29 = vector.shape_cast %26 : vector<1x16xf32> to vector<1x1x16xf32>
    tpu.vector_store %arg8[%c0_18, %c0_19, %c0_20], %29 {strides = array<i32>} : memref<1x1x16xf32, #tpu.memory_space<vmem>>, vector<1x1x16xf32>,
    return
  }
  func.func @transform_0(%arg0: i32) -> (i32, i32) {
    %c0_i32 = arith.constant 0 : i32
    %c0_i32_0 = arith.constant 0 : i32
    return %arg0, %c0_i32 : i32, i32
  }
  func.func @transform_1(%arg0: i32) -> (i32, i32) {
    %c0_i32 = arith.constant 0 : i32
    %c0_i32_0 = arith.constant 0 : i32
    %c0_i32_1 = arith.constant 0 : i32
    return %c0_i32, %c0_i32_0 : i32, i32
  }
  func.func @transform_2(%arg0: i32) -> (i32, i32) {
    %c0_i32 = arith.constant 0 : i32
    %c0_i32_0 = arith.constant 0 : i32
    %c0_i32_1 = arith.constant 0 : i32
    return %c0_i32, %c0_i32_0 : i32, i32
  }
  func.func @transform_3(%arg0: i32) -> (i32, i32) {
    %c0_i32 = arith.constant 0 : i32
    %c0_i32_0 = arith.constant 0 : i32
    %c0_i32_1 = arith.constant 0 : i32
    return %c0_i32, %c0_i32_0 : i32, i32
  }
  func.func @transform_4(%arg0: i32) -> (i32, i32) {
    %c0_i32 = arith.constant 0 : i32
    %c0_i32_0 = arith.constant 0 : i32
    %c0_i32_1 = arith.constant 0 : i32
    return %c0_i32, %c0_i32_0 : i32, i32
  }
  func.func @transform_5(%arg0: i32) -> (i32, i32) {
    %c0_i32 = arith.constant 0 : i32
    %c0_i32_0 = arith.constant 0 : i32
    %c0_i32_1 = arith.constant 0 : i32
    return %c0_i32, %c0_i32_0 : i32, i32
  }
  func.func @transform_6(%arg0: i32) -> (i32, i32) {
    %c0_i32 = arith.constant 0 : i32
    %c0_i32_0 = arith.constant 0 : i32
    %c0_i32_1 = arith.constant 0 : i32
    return %c0_i32, %c0_i32_0 : i32, i32
  }
  func.func @transform_7(%arg0: i32) -> (i32, i32, i32) {
    %c0_i32 = arith.constant 0 : i32
    %c0_i32_0 = arith.constant 0 : i32
    %c0_i32_1 = arith.constant 0 : i32
    return %arg0, %c0_i32, %c0_i32_0 : i32, i32, i32
  }
}

</mosaic_0001>

<llo_original>
// kernel: tpu_custom_call.1
$region0: #{tpu_custom_call.1}
  #allocation0 [shape = 'u32[]', space=smem, size = 0x4, offset = 0x4, fixed_abs, tag = 'smem constant byte address 0x4 - core index']
  #allocation1 [shape = 'u32[144,128]{1,0:T(1,128)}', space=vmem, size = 0x12000, scoped, tag = 'internal scratch']
  #allocation2 [shape = 'f32[1,1]{1,0:T(1,128)S(6)}', space=smem, size = 0x200, scoped, tag = 'scoped memory for tpu_custom_call.1']
  %s0 = inlined_call_operand.vmem [shape: f32[20,32], index: 0, kind: input, shape index: {}]
  %s1 = inlined_call_operand.vmem [shape: bf16[32,128], index: 1, kind: input, shape index: {}]
  %s2 = inlined_call_operand.vmem [shape: f32[1,128], index: 2, kind: input, shape index: {}]
  %s3 = inlined_call_operand.vmem [shape: bf16[128,64], index: 3, kind: input, shape index: {}]
  %s4 = inlined_call_operand.vmem [shape: f32[1,64], index: 4, kind: input, shape index: {}]
  %s5 = inlined_call_operand.vmem [shape: f32[1,64], index: 5, kind: input, shape index: {}]
  %s6 = inlined_call_operand.<no memory space> [shape: f32[1,1], index: 6, kind: input, shape index: {}]
  %s7 = inlined_call_operand.hbm [shape: f32[2,1,16], index: 7, kind: output, shape index: {}]
  %s8 = sld [smem:[#allocation0]]
  $region61: #{tpu_custom_call.1} parent=0
    _
  %s10 = ssub.s32 1, %s8
  %s11 = scalar_select 0, %s10, %s8
  %12 = sst [smem:[#allocation2]] %s6
  $region1: #{tpu_custom_call.1} parent=0
    #allocation3 [shape = 'u8[1024]{0}', space=vmem, size = 0x400, scoped, tag = 'output window, operand 0']
    #allocation4 [shape = 's32[2]{0}', space=sflag, size = 0x8, scoped, tag = 'scoped memory for tpu_custom_call.1']
    %13 = vsyncpa [#allocation4], 0
    %s14 = scalar_lea.sflag [#allocation4], 1
    %15 = vsyncpa %s14, 0
    loop: start=0, step=1, limit=4
    $region2: #{tpu_custom_call.1} parent=1 // loop_pre_header
      _
    $region3: #{tpu_custom_call.1} parent=1 // loop_header
      %s17 = sphi 0, %s21
      %p18 = scmp.ge.s32.totalorder %s17, 4
      %s27 = sphi 0, %s29
      %s30 = sphi 0, %s27
      %s31 = sphi 0, %s30
      %s47 = sphi 0, %s31
      %s51 = sphi 0, %s51
      %s53 = sphi 0, %s51
      %s54 = sphi 0, %s53
      %s68 = sphi 0, %s54
      %s72 = sphi 0, %s72
      %s74 = sphi 0, %s72
      %s75 = sphi 0, %s74
      %s89 = sphi 0, %s75
      %s93 = sphi 0, %s93
      %s95 = sphi 0, %s93
      %s96 = sphi 0, %s95
      %s110 = sphi 0, %s96
      %s114 = sphi 0, %s114
      %s116 = sphi 0, %s114
      %s117 = sphi 0, %s116
      %s131 = sphi 0, %s117
      %s135 = sphi 0, %s135
      %s137 = sphi 0, %s135
      %s138 = sphi 0, %s137
      %s152 = sphi 0, %s138
      %s156 = sphi 0, %s156
      %s158 = sphi 0, %s156
      %s159 = sphi 0, %s158
      %s173 = sphi 0, %s159
      %s179 = sphi 0, %s181
      %s182 = sphi 0, %s179
      %s183 = sphi 0, %s182
      %s199 = sphi 0, %s183
    $region4: #{tpu_custom_call.1} parent=1 // loop_header_branch
      %20 = sbr.rel (%p18) target = $region8
    $region5: #{tpu_custom_call.1} parent=1 // loop_body
      %s22 = ssub.s32 %s17, 1
      %s23 = ssub.s32 %s17, 2
      %s24 = sadd.s32 %s17, 1
      %s25 = ssub.s32 %s17, %s24
      %p26 = scmp.eq.s32.totalorder %s25, 0
      %s28 = sadd.s32 %s27, 1
      %s29 = scalar_select %p26, %s27, %s28
      %p32 = pneg %p26
      %p33 = scmp.eq.s32.totalorder %s17, 1
      %p34 = por %p32, %p33
      %p35 = scmp.ne.s32.totalorder %s27, %s30
      %p36 = scmp.eq.s32.totalorder %s17, 0
      %p37 = por %p35, %p36
      %p38 = scmp.ne.s32.totalorder %s27, %s30
      %p39 = scmp.eq.s32.totalorder %s22, 1
      %p40 = por %p38, %p39
      %p41 = scmp.ne.s32.totalorder %s30, %s31
      %p42 = scmp.eq.s32.totalorder %s22, 0
      %p43 = por %p41, %p42
      %p44 = scmp.ne.s32.totalorder %s30, %s31
      %p45 = scmp.eq.s32.totalorder %s23, 1
      %p46 = por %p44, %p45
      %p48 = scmp.ne.s32.totalorder %s31, %s47
      %p49 = scmp.eq.s32.totalorder %s23, 0
      %p50 = por %p48, %p49
      %s52 = sadd.s32 %s51, 1
      %p55 = scmp.eq.s32.totalorder %s17, 1
      %p56 = scmp.ne.s32.totalorder %s51, %s53
      %p57 = scmp.eq.s32.totalorder %s17, 0
      %p58 = por %p56, %p57
      %p59 = scmp.ne.s32.totalorder %s51, %s53
      %p60 = scmp.eq.s32.totalorder %s22, 1
      %p61 = por %p59, %p60
      %p62 = scmp.ne.s32.totalorder %s53, %s54
      %p63 = scmp.eq.s32.totalorder %s22, 0
      %p64 = por %p62, %p63
      %p65 = scmp.ne.s32.totalorder %s53, %s54
      %p66 = scmp.eq.s32.totalorder %s23, 1
      %p67 = por %p65, %p66
      %p69 = scmp.ne.s32.totalorder %s54, %s68
      %p70 = scmp.eq.s32.totalorder %s23, 0
      %p71 = por %p69, %p70
      %s73 = sadd.s32 %s72, 1
      %p76 = scmp.eq.s32.totalorder %s17, 1
      %p77 = scmp.ne.s32.totalorder %s72, %s74
      %p78 = scmp.eq.s32.totalorder %s17, 0
      %p79 = por %p77, %p78
      %p80 = scmp.ne.s32.totalorder %s72, %s74
      %p81 = scmp.eq.s32.totalorder %s22, 1
      %p82 = por %p80, %p81
      %p83 = scmp.ne.s32.totalorder %s74, %s75
      %p84 = scmp.eq.s32.totalorder %s22, 0
      %p85 = por %p83, %p84
      %p86 = scmp.ne.s32.totalorder %s74, %s75
      %p87 = scmp.eq.s32.totalorder %s23, 1
      %p88 = por %p86, %p87
      %p90 = scmp.ne.s32.totalorder %s75, %s89
      %p91 = scmp.eq.s32.totalorder %s23, 0
      %p92 = por %p90, %p91
      %s94 = sadd.s32 %s93, 1
      %p97 = scmp.eq.s32.totalorder %s17, 1
      %p98 = scmp.ne.s32.totalorder %s93, %s95
      %p99 = scmp.eq.s32.totalorder %s17, 0
      %p100 = por %p98, %p99
      %p101 = scmp.ne.s32.totalorder %s93, %s95
      %p102 = scmp.eq.s32.totalorder %s22, 1
      %p103 = por %p101, %p102
      %p104 = scmp.ne.s32.totalorder %s95, %s96
      %p105 = scmp.eq.s32.totalorder %s22, 0
      %p106 = por %p104, %p105
      %p107 = scmp.ne.s32.totalorder %s95, %s96
      %p108 = scmp.eq.s32.totalorder %s23, 1
      %p109 = por %p107, %p108
      %p111 = scmp.ne.s32.totalorder %s96, %s110
      %p112 = scmp.eq.s32.totalorder %s23, 0
      %p113 = por %p111, %p112
      %s115 = sadd.s32 %s114, 1
      %p118 = scmp.eq.s32.totalorder %s17, 1
      %p119 = scmp.ne.s32.totalorder %s114, %s116
      %p120 = scmp.eq.s32.totalorder %s17, 0
      %p121 = por %p119, %p120
      %p122 = scmp.ne.s32.totalorder %s114, %s116
      %p123 = scmp.eq.s32.totalorder %s22, 1
      %p124 = por %p122, %p123
      %p125 = scmp.ne.s32.totalorder %s116, %s117
      %p126 = scmp.eq.s32.totalorder %s22, 0
      %p127 = por %p125, %p126
      %p128 = scmp.ne.s32.totalorder %s116, %s117
      %p129 = scmp.eq.s32.totalorder %s23, 1
      %p130 = por %p128, %p129
      %p132 = scmp.ne.s32.totalorder %s117, %s131
      %p133 = scmp.eq.s32.totalorder %s23, 0
      %p134 = por %p132, %p133
      %s136 = sadd.s32 %s135, 1
      %p139 = scmp.eq.s32.totalorder %s17, 1
      %p140 = scmp.ne.s32.totalorder %s135, %s137
      %p141 = scmp.eq.s32.totalorder %s17, 0
      %p142 = por %p140, %p141
      %p143 = scmp.ne.s32.totalorder %s135, %s137
      %p144 = scmp.eq.s32.totalorder %s22, 1
      %p145 = por %p143, %p144
      %p146 = scmp.ne.s32.totalorder %s137, %s138
      %p147 = scmp.eq.s32.totalorder %s22, 0
      %p148 = por %p146, %p147
      %p149 = scmp.ne.s32.totalorder %s137, %s138
      %p150 = scmp.eq.s32.totalorder %s23, 1
      %p151 = por %p149, %p150
      %p153 = scmp.ne.s32.totalorder %s138, %s152
      %p154 = scmp.eq.s32.totalorder %s23, 0
      %p155 = por %p153, %p154
      %s157 = sadd.s32 %s156, 1
      %p160 = scmp.eq.s32.totalorder %s17, 1
      %p161 = scmp.ne.s32.totalorder %s156, %s158
      %p162 = scmp.eq.s32.totalorder %s17, 0
      %p163 = por %p161, %p162
      %p164 = scmp.ne.s32.totalorder %s156, %s158
      %p165 = scmp.eq.s32.totalorder %s22, 1
      %p166 = por %p164, %p165
      %p167 = scmp.ne.s32.totalorder %s158, %s159
      %p168 = scmp.eq.s32.totalorder %s22, 0
      %p169 = por %p167, %p168
      %p170 = scmp.ne.s32.totalorder %s158, %s159
      %p171 = scmp.eq.s32.totalorder %s23, 1
      %p172 = por %p170, %p171
      %p174 = scmp.ne.s32.totalorder %s159, %s173
      %p175 = scmp.eq.s32.totalorder %s23, 0
      %p176 = por %p174, %p175
      %s177 = ssub.s32 %s17, %s24
      %p178 = scmp.eq.s32.totalorder %s177, 0
      %s180 = sadd.s32 %s179, 1
      %s181 = scalar_select %p178, %s179, %s180
      %p184 = pneg %p178
      %p185 = scmp.eq.s32.totalorder %s17, 1
      %p186 = por %p184, %p185
      %p187 = scmp.ne.s32.totalorder %s179, %s182
      %p188 = scmp.eq.s32.totalorder %s17, 0
      %p189 = por %p187, %p188
      %p190 = scmp.ne.s32.totalorder %s179, %s182
      %p191 = scmp.eq.s32.totalorder %s22, 1
      %p192 = por %p190, %p191
      %p193 = scmp.ne.s32.totalorder %s182, %s183
      %p194 = scmp.eq.s32.totalorder %s22, 0
      %p195 = por %p193, %p194
      %p196 = scmp.ne.s32.totalorder %s182, %s183
      %p197 = scmp.eq.s32.totalorder %s23, 1
      %p198 = por %p196, %p197
      %p200 = scmp.ne.s32.totalorder %s183, %s199
      %p201 = scmp.eq.s32.totalorder %s23, 0
      %p202 = por %p200, %p201
      %p203 = scmp.le.s32.totalorder 1, %s17
      %p204 = scmp.lt.s32.totalorder %s17, 3
      %p205 = pnand %p203, %p204
      %p206 = pneg %p205
      // Predicated region
      $region9: #{tpu_custom_call.1} parent=5 // pred_check
        _
      $region10: #{tpu_custom_call.1} parent=5 // pred_check_branch
        %208 = sbr.rel (%p205) target = $region12
      $region11: #{tpu_custom_call.1} parent=5 // pred_region
        %s209 = ssub.s32 %s17, 1
        // Predicated region
        $region13: #{tpu_custom_call.1} parent=11 // pred_check
          %p210 = pneg %p64
        $region14: #{tpu_custom_call.1} parent=11 // pred_check_branch
          %212 = sbr.rel (%p210) target = $region16
        $region15: #{tpu_custom_call.1} parent=11 // pred_region
          _
        $region16: #{tpu_custom_call.1} parent=11 // pred_fallthru
          _
        // Predicated region
        $region17: #{tpu_custom_call.1} parent=11 // pred_check
          %p213 = pneg %p85
        $region18: #{tpu_custom_call.1} parent=11 // pred_check_branch
          %215 = sbr.rel (%p213) target = $region20
        $region19: #{tpu_custom_call.1} parent=11 // pred_region
          _
        $region20: #{tpu_custom_call.1} parent=11 // pred_fallthru
          _
        // Predicated region
        $region21: #{tpu_custom_call.1} parent=11 // pred_check
          %p216 = pneg %p106
        $region22: #{tpu_custom_call.1} parent=11 // pred_check_branch
          %218 = sbr.rel (%p216) target = $region24
        $region23: #{tpu_custom_call.1} parent=11 // pred_region
          _
        $region24: #{tpu_custom_call.1} parent=11 // pred_fallthru
          _
        // Predicated region
        $region25: #{tpu_custom_call.1} parent=11 // pred_check
          %p219 = pneg %p127
        $region26: #{tpu_custom_call.1} parent=11 // pred_check_branch
          %221 = sbr.rel (%p219) target = $region28
        $region27: #{tpu_custom_call.1} parent=11 // pred_region
          _
        $region28: #{tpu_custom_call.1} parent=11 // pred_fallthru
          _
        // Predicated region
        $region29: #{tpu_custom_call.1} parent=11 // pred_check
          %p222 = pneg %p148
        $region30: #{tpu_custom_call.1} parent=11 // pred_check_branch
          %224 = sbr.rel (%p222) target = $region32
        $region31: #{tpu_custom_call.1} parent=11 // pred_region
          _
        $region32: #{tpu_custom_call.1} parent=11 // pred_fallthru
          _
        // Predicated region
        $region33: #{tpu_custom_call.1} parent=11 // pred_check
          %p225 = pneg %p169
        $region34: #{tpu_custom_call.1} parent=11 // pred_check_branch
          %227 = sbr.rel (%p225) target = $region36
        $region35: #{tpu_custom_call.1} parent=11 // pred_region
          _
        $region36: #{tpu_custom_call.1} parent=11 // pred_fallthru
          _
      $region12: #{tpu_custom_call.1} parent=5 // pred_fallthru
        _
      %p228 = scmp.lt.s32.totalorder %s17, 2
      // Predicated region
      $region37: #{tpu_custom_call.1} parent=5 // pred_check
        %p229 = pneg %p228
      $region38: #{tpu_custom_call.1} parent=5 // pred_check_branch
        %231 = sbr.rel (%p229) target = $region40
      $region39: #{tpu_custom_call.1} parent=5 // pred_region
        // Predicated region
        $region41: #{tpu_custom_call.1} parent=39 // pred_check
          %p232 = pneg %p37
        $region42: #{tpu_custom_call.1} parent=39 // pred_check_branch
          %234 = sbr.rel (%p232) target = $region44
        $region43: #{tpu_custom_call.1} parent=39 // pred_region
          %s235 = smul.u32 2, %s17
          %s236 = ssub.s32 3, %s235
          %p237 = scmp.lt.s32.totalorder %s236, 2
          %s238 = scalar_select %p237, %s236, 2
          %s239 = smul.u32 128, %s238
          %p240 = scmp.lt.s32.totalorder %s235, 2
          %s241 = scalar_select %p240, %s235, 2
          %s242 = smul.addr %s241, 8
          %s243 = scalar_lea.vmem %s0, %s242
          %s244 = smul.u32 2, %s17
          %s245 = ssub.s32 3, %s244
          %p246 = scmp.lt.s32.totalorder %s245, 2
          %s247 = scalar_select %p246, %s245, 2
          %s248 = smul.u32 128, %s247
        $region44: #{tpu_custom_call.1} parent=39 // pred_fallthru
          _
      $region40: #{tpu_custom_call.1} parent=5 // pred_fallthru
        _
      %p249 = scmp.le.s32.totalorder 1, %s17
      %p250 = scmp.lt.s32.totalorder %s17, 3
      %p251 = pnand %p249, %p250
      %p252 = pneg %p251
      // Predicated region
      $region45: #{tpu_custom_call.1} parent=5 // pred_check
        _
      $region46: #{tpu_custom_call.1} parent=5 // pred_check_branch
        %254 = sbr.rel (%p251) target = $region48
      $region47: #{tpu_custom_call.1} parent=5 // pred_region
        %s255 = ssub.s32 %s17, 1
        %s256 = smul.u32 2, %s22
        %s257 = ssub.s32 3, %s256
        %p258 = scmp.lt.s32.totalorder %s257, 2
        %s259 = scalar_select %p258, %s257, 2
        %s260 = smul.u32 128, %s259
        %p261 = scmp.lt.s32.totalorder %s256, 2
        %s262 = scalar_select %p261, %s256, 2
        %s263 = smul.addr %s262, 8
        %s264 = scalar_lea.vmem %s0, %s263
        %p265 = pneg %p43
        %p266 = pneg %p40
        %p267 = pneg %p64
        %p268 = pneg %p61
        %p269 = pneg %p85
        %p270 = pneg %p82
        %p271 = pneg %p106
        %p272 = pneg %p103
        %p273 = pneg %p127
        %p274 = pneg %p124
        %p275 = pneg %p148
        %p276 = pneg %p145
        %p277 = pneg %p169
        %p278 = pneg %p166
        %p279 = pneg %p195
        %p280 = pneg %p192
        %s281 = sand.u32 %s182, 1
        %s282 = scalar_lea.sflag [#allocation4], %s281
        %s283 = sand.u32 %s182, 1
        %s284 = scalar_lea.vmem [#allocation3], %s283
        %s285 = smul.u32 2, %s22
        %s286 = ssub.s32 3, %s285
        %p287 = scmp.lt.s32.totalorder %s286, 2
        %s288 = scalar_select %p287, %s286, 2
        %s289 = smul.u32 128, %s288
        %p290 = scmp.lt.s32.totalorder %s285, 2
        %s291 = scalar_select %p290, %s285, 2
        %s292 = smul.addr %s291, 8
        %s293 = scalar_lea.vmem %s0, %s292
        %s294 = smul.u32 2, %s22
        %s295 = ssub.s32 3, %s294
        %p296 = scmp.lt.s32.totalorder %s295, 2
        %s297 = scalar_select %p296, %s295, 2
        %s298 = smul.u32 128, %s297
        %v300 = vld [vmem:[%s293] sm:$0xff]
        %v301 = vld [vmem:[%s293 + $0x8] sm:$0xff]
        %v302 = vpack.c.bf16 %v301, %v300
        %v303 = vld [vmem:[%s1] sm:$0xf]
        %v304 = vld [vmem:[%s1 + $0x4] sm:$0xf]
        %v305 = vld [vmem:[%s1 + $0x8] sm:$0xf]
        %v306 = vld [vmem:[%s1 + $0xc] sm:$0xf]
        %v307 = vld [vmem:[%s2] sm:$0x1]
        %v309 = vlaneseq
        %v310 = vshrl.u32 %v309, 7
        %v311 = vsub.s32 0, %v310
        %v312 = vrot.slane %v307, %v311
        %v318 = vunpack.c.l.b16 %v303
        %v319 = vunpack.c.l.b16 %v304
        %v320 = vunpack.c.l.b16 %v305
        %v321 = vunpack.c.l.b16 %v306
        %v322 = vpack.c.b16 %v319, %v318
        %v323 = vpack.c.b16 %v321, %v320
        %vm326 = vcmask 261120
        %v328 = vsel %vm326, %v302, 0
        %330 = vmatprep.subr.bf16.mxu0 0
        %331 = vmatpush1.bf16.msra.mxu0 %v322
        %332 = vmatprep.subr.bf16.mxu0 0
        %333 = vmatpush1.bf16.msra.mxu0 %v323
        %334 = vmatprep.subr.bf16.mxu0 0
        %335 = vmatpush1.bf16.msra.mxu0 0
        %336 = vmatprep.subr.bf16.mxu0 0
        %337 = vmatpush1.bf16.msra.mxu0 0
        %338 = vmatprep.subr.bf16.mxu0 0
        %339 = vmatpush1.bf16.msra.mxu0 0
        %340 = vmatprep.subr.bf16.mxu0 0
        %341 = vmatpush1.bf16.msra.mxu0 0
        %342 = vmatprep.subr.bf16.mxu0 0
        %343 = vmatpush1.bf16.msra.mxu0 0
        %344 = vmatprep.subr.bf16.mxu0 0
        %345 = vmatpush1.bf16.msra.mxu0 0
        %346 = vmatprep.subr.bf16.mxu0 0
        %347 = vmatpush1.bf16.msra.mxu0 0
        %348 = vmatprep.subr.bf16.mxu0 0
        %349 = vmatpush1.bf16.msra.mxu0 0
        %350 = vmatprep.subr.bf16.mxu0 0
        %351 = vmatpush1.bf16.msra.mxu0 0
        %352 = vmatprep.subr.bf16.mxu0 0
        %353 = vmatpush1.bf16.msra.mxu0 0
        %354 = vmatprep.subr.bf16.mxu0 0
        %355 = vmatpush1.bf16.msra.mxu0 0
        %356 = vmatprep.subr.bf16.mxu0 0
        %357 = vmatpush1.bf16.msra.mxu0 0
        %358 = vmatprep.subr.bf16.mxu0 0
        %359 = vmatpush1.bf16.msra.mxu0 0
        %360 = vmatprep.subr.bf16.mxu0 0
        %361 = vmatpush1.bf16.msra.mxu0 0
        %362 = vmatprep.mubr.bf16.mxu0 0
        %363 = vmatmul.mubr.bf16.gmra.mrb[0].mxu0 %v328
        %v364 = vpop.f32.mrb[0].mxu0
        %v365 = vadd.f32 %v312, %v364
        %v366 = vpop.f32.mrb[0].mxu0
        %v367 = vpop.f32.mrb[0].mxu0
        %v368 = vadd.f32 %v312, %v367
        %v369 = vpop.f32.mrb[0].mxu0
        %370 = vdwg.mxu0
        %v371 = vmax.f32 %v365, 0.0
        %v372 = vmax.f32 %v368, 0.0
        %v373 = vpack.c.bf16 %v372, %v371
        %v374 = vld [vmem:[%s3] sm:$0xf]
        %v375 = vld [vmem:[%s3 + $0x4] sm:$0xf]
        %v376 = vld [vmem:[%s3 + $0x8] sm:$0xf]
        %v377 = vld [vmem:[%s3 + $0xc] sm:$0xf]
        %v378 = vld [vmem:[%s3 + $0x10] sm:$0xf]
        %v379 = vld [vmem:[%s3 + $0x14] sm:$0xf]
        %v380 = vld [vmem:[%s3 + $0x18] sm:$0xf]
        %v381 = vld [vmem:[%s3 + $0x1c] sm:$0xf]
        %v382 = vld [vmem:[%s3 + $0x20] sm:$0xf]
        %v383 = vld [vmem:[%s3 + $0x24] sm:$0xf]
        %v384 = vld [vmem:[%s3 + $0x28] sm:$0xf]
        %v385 = vld [vmem:[%s3 + $0x2c] sm:$0xf]
        %v386 = vld [vmem:[%s3 + $0x30] sm:$0xf]
        %v387 = vld [vmem:[%s3 + $0x34] sm:$0xf]
        %v388 = vld [vmem:[%s3 + $0x38] sm:$0xf]
        %v389 = vld [vmem:[%s3 + $0x3c] sm:$0xf]
        %v390 = vld [vmem:[%s4] sm:$0x1]
        %v392 = vlaneseq
        %v393 = vshrl.u32 %v392, 7
        %v394 = vsub.s32 0, %v393
        %v395 = vrot.slane %v390, %v394
        %v413 = vunpack.c.l.b16 %v374
        %v414 = vunpack.c.l.b16 %v375
        %v415 = vunpack.c.l.b16 %v376
        %v416 = vunpack.c.l.b16 %v377
        %v417 = vunpack.c.l.b16 %v378
        %v418 = vunpack.c.l.b16 %v379
        %v419 = vunpack.c.l.b16 %v380
        %v420 = vunpack.c.l.b16 %v381
        %v421 = vunpack.c.l.b16 %v382
        %v422 = vunpack.c.l.b16 %v383
        %v423 = vunpack.c.l.b16 %v384
        %v424 = vunpack.c.l.b16 %v385
        %v425 = vunpack.c.l.b16 %v386
        %v426 = vunpack.c.l.b16 %v387
        %v427 = vunpack.c.l.b16 %v388
        %v428 = vunpack.c.l.b16 %v389
        %v429 = vpack.c.b16 %v414, %v413
        %v430 = vpack.c.b16 %v416, %v415
        %v431 = vpack.c.b16 %v418, %v417
        %v432 = vpack.c.b16 %v420, %v419
        %v433 = vpack.c.b16 %v422, %v421
        %v434 = vpack.c.b16 %v424, %v423
        %v435 = vpack.c.b16 %v426, %v425
        %v436 = vpack.c.b16 %v428, %v427
        %445 = vmatprep.subr.bf16.mxu0 0
        %446 = vmatpush1.bf16.msra.mxu0 %v429
        %447 = vmatprep.subr.bf16.mxu0 0
        %448 = vmatpush1.bf16.msra.mxu0 %v430
        %449 = vmatprep.subr.bf16.mxu0 0
        %450 = vmatpush1.bf16.msra.mxu0 %v431
        %451 = vmatprep.subr.bf16.mxu0 0
        %452 = vmatpush1.bf16.msra.mxu0 %v432
        %453 = vmatprep.subr.bf16.mxu0 0
        %454 = vmatpush1.bf16.msra.mxu0 %v433
        %455 = vmatprep.subr.bf16.mxu0 0
        %456 = vmatpush1.bf16.msra.mxu0 %v434
        %457 = vmatprep.subr.bf16.mxu0 0
        %458 = vmatpush1.bf16.msra.mxu0 %v435
        %459 = vmatprep.subr.bf16.mxu0 0
        %460 = vmatpush1.bf16.msra.mxu0 %v436
        %461 = vmatprep.subr.bf16.mxu0 0
        %462 = vmatpush1.bf16.msra.mxu0 0
        %463 = vmatprep.subr.bf16.mxu0 0
        %464 = vmatpush1.bf16.msra.mxu0 0
        %465 = vmatprep.subr.bf16.mxu0 0
        %466 = vmatpush1.bf16.msra.mxu0 0
        %467 = vmatprep.subr.bf16.mxu0 0
        %468 = vmatpush1.bf16.msra.mxu0 0
        %469 = vmatprep.subr.bf16.mxu0 0
        %470 = vmatpush1.bf16.msra.mxu0 0
        %471 = vmatprep.subr.bf16.mxu0 0
        %472 = vmatpush1.bf16.msra.mxu0 0
        %473 = vmatprep.subr.bf16.mxu0 0
        %474 = vmatpush1.bf16.msra.mxu0 0
        %475 = vmatprep.subr.bf16.mxu0 0
        %476 = vmatpush1.bf16.msra.mxu0 0
        %477 = vmatprep.mubr.bf16.mxu0 0
        %478 = vmatmul.mubr.bf16.gmra.mrb[0].mxu0 %v373
        %v479 = vpop.f32.mrb[0].mxu0
        %v480 = vadd.f32 %v395, %v479
        %v481 = vpop.f32.mrb[0].mxu0
        %v482 = vpop.f32.mrb[0].mxu0
        %v483 = vadd.f32 %v395, %v482
        %v484 = vpop.f32.mrb[0].mxu0
        %485 = vdwg.mxu0
        %v486 = vmax.f32 %v480, 0.0
        %v487 = vmax.f32 %v483, 0.0
        %v488 = vld [vmem:[%s5] sm:$0x1]
        %s489 = sld [smem:[#allocation2]]
        %v490 = vstv %s489
        %vm491 = vcmask 523264
        %v493 = vsel %vm491, %v488, 0
        %v496 = vsel %vm491, %v486, 0
        %v499 = vsel %vm491, %v487, 0
        %501 = vmatprep.subr.mxu0 0.0
        %502 = vmatpush1.xpose.msra.mxu0 %v496
        %503 = vmatprep.subr.mxu0 0.0
        %504 = vmatpush1.xpose.msra.mxu0 %v499
        %505 = vmatprep.subr.mxu0 0.0
        %506 = vmatpush1.xpose.msra.mxu0 0.0
        %507 = vmatprep.subr.mxu0 0.0
        %508 = vmatpush1.xpose.msra.mxu0 0.0
        %509 = vmatprep.subr.mxu0 0.0
        %510 = vmatpush1.xpose.msra.mxu0 0.0
        %511 = vmatprep.subr.mxu0 0.0
        %512 = vmatpush1.xpose.msra.mxu0 0.0
        %513 = vmatprep.subr.mxu0 0.0
        %514 = vmatpush1.xpose.msra.mxu0 0.0
        %515 = vmatprep.subr.mxu0 0.0
        %516 = vmatpush1.xpose.msra.mxu0 0.0
        %517 = vmatprep.subr.mxu0 0.0
        %518 = vmatpush1.xpose.msra.mxu0 0.0
        %519 = vmatprep.subr.mxu0 0.0
        %520 = vmatpush1.xpose.msra.mxu0 0.0
        %521 = vmatprep.subr.mxu0 0.0
        %522 = vmatpush1.xpose.msra.mxu0 0.0
        %523 = vmatprep.subr.mxu0 0.0
        %524 = vmatpush1.xpose.msra.mxu0 0.0
        %525 = vmatprep.subr.mxu0 0.0
        %526 = vmatpush1.xpose.msra.mxu0 0.0
        %527 = vmatprep.subr.mxu0 0.0
        %528 = vmatpush1.xpose.msra.mxu0 0.0
        %529 = vmatprep.subr.mxu0 0.0
        %530 = vmatpush1.xpose.msra.mxu0 0.0
        %531 = vmatprep.subr.mxu0 0.0
        %532 = vmatpush1.xpose.msra.mxu0 0.0
        %533 = vmatprep.subr.mxu0 0.0
        %534 = vmatpush1.xpose.msra.mxu0 0.0
        %535 = vmatprep.subr.mxu0 0.0
        %536 = vmatpush1.xpose.msra.mxu0 0.0
        %537 = vmatprep.subr.mxu0 0.0
        %538 = vmatpush1.xpose.msra.mxu0 0.0
        %539 = vmatprep.subr.mxu0 0.0
        %540 = vmatpush1.xpose.msra.mxu0 0.0
        %541 = vmatprep.subr.mxu0 0.0
        %542 = vmatpush1.xpose.msra.mxu0 0.0
        %543 = vmatprep.subr.mxu0 0.0
        %544 = vmatpush1.xpose.msra.mxu0 0.0
        %545 = vmatprep.subr.mxu0 0.0
        %546 = vmatpush1.xpose.msra.mxu0 0.0
        %547 = vmatprep.subr.mxu0 0.0
        %548 = vmatpush1.xpose.msra.mxu0 0.0
        %549 = vmatprep.subr.mxu0 0.0
        %550 = vmatpush1.xpose.msra.mxu0 0.0
        %551 = vmatprep.subr.mxu0 0.0
        %552 = vmatpush1.xpose.msra.mxu0 0.0
        %553 = vmatprep.subr.mxu0 0.0
        %554 = vmatpush1.xpose.msra.mxu0 0.0
        %555 = vmatprep.subr.mxu0 0.0
        %556 = vmatpush1.xpose.msra.mxu0 0.0
        %557 = vmatprep.subr.mxu0 0.0
        %558 = vmatpush1.xpose.msra.mxu0 0.0
        %559 = vmatprep.subr.mxu0 0.0
        %560 = vmatpush1.xpose.msra.mxu0 0.0
        %561 = vmatprep.subr.mxu0 0.0
        %562 = vmatpush1.xpose.msra.mxu0 0.0
        %563 = vmatprep.subr.mxu0 0.0
        %564 = vmatpush1.xpose.msra.mxu0 0.0
        %565 = vmatprep.mubr.f32.mxu0 0.0
        %566 = vmatmul.mubr.f32.gmra.mrb[0].mxu0 %v493
        %v567 = vpop.f32.mrb[0].mxu0
        %v568 = vadd.f32 %v490, %v567
        %v569 = vpop.f32.mrb[0].mxu0
        %570 = vdwg.mxu0
        %v571 = vxor.u32 %v568, 2147483648
        %v572 = vmul.f32 %v571, 1.442695
        %v573 = vpow.pop %v572
        %v574 = vadd.f32 %v573, 1.0
        %v575 = vrcp.pop %v574
        %v576 = vmul.f32 1.0, %v575
        %vm577 = vcmask 122880
        %578 = vst.msk [vmem:[%s284] sm:$0x1] %vm577, %v576
        %s579 = sand.u32 %s182, 1
        %s580 = scalar_lea.sflag [#allocation4], %s579
        %s581 = sand.u32 %s182, 1
        %s582 = scalar_lea.vmem [#allocation3], %s581
        // Predicated region
        $region49: #{tpu_custom_call.1} parent=47 // pred_check
          %p583 = pneg %p192
        $region50: #{tpu_custom_call.1} parent=47 // pred_check_branch
          %585 = sbr.rel (%p583) target = $region52
        $region51: #{tpu_custom_call.1} parent=47 // pred_region
          %s587 = ssub.s32 16, 16
          %588 = vsyncadd %s580, %s587
          %s589 = smul.addr %s22, 16
          %s590 = scalar_lea.hbm %s7, %s589
          %s592 = sshll.u32 %s582, 4
          %s593 = int_to_ptr.vmem [resolvable:$true] %s592
          %595 = dma.vmem_to_hbm [thread:$0]  %s593, 16, %s590, %s580
        $region52: #{tpu_custom_call.1} parent=47 // pred_fallthru
          _
      $region48: #{tpu_custom_call.1} parent=5 // pred_fallthru
        _
      %p596 = scmp.le.s32.totalorder 2, %s17
      // Predicated region
      $region53: #{tpu_custom_call.1} parent=5 // pred_check
        %p597 = pneg %p596
      $region54: #{tpu_custom_call.1} parent=5 // pred_check_branch
        %599 = sbr.rel (%p597) target = $region56
      $region55: #{tpu_custom_call.1} parent=5 // pred_region
        %s600 = ssub.s32 %s17, 2
        // Predicated region
        $region57: #{tpu_custom_call.1} parent=55 // pred_check
          %p601 = pneg %p198
        $region58: #{tpu_custom_call.1} parent=55 // pred_check_branch
          %603 = sbr.rel (%p601) target = $region60
        $region59: #{tpu_custom_call.1} parent=55 // pred_region
          %s604 = sand.u32 %s183, 1
          %s605 = scalar_lea.sflag [#allocation4], %s604
          %s606 = sand.u32 %s183, 1
          %s607 = scalar_lea.vmem [#allocation3], %s606
          %608 = dma.done %s605, 16
        $region60: #{tpu_custom_call.1} parent=55 // pred_fallthru
          _
      $region56: #{tpu_custom_call.1} parent=5 // pred_fallthru
        _
    $region6: #{tpu_custom_call.1} parent=1 // loop_footer
      %s21 = sadd.s32 1, %s17
    $region7: #{tpu_custom_call.1} parent=1 // loop_footer_branch
      %16 = sbr.rel target = $region3
    $region8: #{tpu_custom_call.1} parent=1 // loop_exit
      _
    %609 = vsyncpa [#allocation4], 1
    %s610 = scalar_lea.sflag [#allocation4], 1
    %611 = vsyncpa %s610, 1

</llo_original>
